<compile_context>
chip_gen: v5e
topology: v5e:2x2
jax: 0.10.0
libtpu: 0.0.40
codegen_flags: <defaults>
</compile_context>

<pallas_src>
import jax
import jax.numpy as jnp
from jax.experimental import pallas as pl
from jax.experimental.pallas import tpu as pltpu

LEAKY_SLOPE = 0.01            # PyTorch nn.LeakyReLU default negative_slope
OUT_W = 128                   # lane-dense output slab; real output is column 0
TB_MAX = 512                  # max batch tile (fits comfortably in scoped VMEM on v5e/v6e/v7x)
TB_MIN = 16                   # bf16 sublane tile


def _round_up(n, m):
    return (n + m - 1) // m * m


def _leaky_relu(x):
    return jnp.where(x > 0, x, LEAKY_SLOPE * x)


def mlp_kernel(x_ref, w1_ref, wh_ref, b_ref, w7_ref, o_ref):
    # x arrives as bf16; all matmuls are bf16 x bf16 -> f32 accumulate (MXU),
    # bias add + LeakyReLU stay in f32 (VPU).
    h = x_ref[...]                                              # bf16 [TB, D_pad]

    # Layer 1: Linear(D_pad, H_pad) + LeakyReLU
    z = jnp.dot(h, w1_ref[...], preferred_element_type=jnp.float32) + b_ref[0:1, :]
    h = _leaky_relu(z).astype(jnp.bfloat16)

    # Layers 2..6: Linear(H_pad, H_pad) + LeakyReLU (weights stacked in wh_ref)
    for i in range(5):
        z = jnp.dot(h, wh_ref[i], preferred_element_type=jnp.float32) + b_ref[i + 1:i + 2, :]
        h = _leaky_relu(z).astype(jnp.bfloat16)

    # Final layer: Linear(H_pad, OUT_W) (no activation); only column 0 is real.
    out = jnp.dot(h, w7_ref[...], preferred_element_type=jnp.float32) + b_ref[6:7, :OUT_W]
    o_ref[...] = out.astype(o_ref.dtype)


def pack_params(params):
    """Pack the 7 (W, b) pairs once into padded, kernel-ready operands (call once)."""
    (w1, b1) = params[0]
    hidden = params[1:6]
    (w7, b7) = params[6]
    D, H = w1.shape
    D_pad = _round_up(D, 128)
    H_pad = _round_up(H, 128)

    w1_p = jnp.zeros((D_pad, H_pad), jnp.bfloat16).at[:D, :H].set(w1.astype(jnp.bfloat16))
    wh_p = jnp.zeros((5, H_pad, H_pad), jnp.bfloat16)
    b_p = jnp.zeros((8, H_pad), jnp.float32)   # rows 0..5: hidden biases, row 6: output bias
    b_p = b_p.at[0, :H].set(b1.reshape(-1))
    for i, (w, b) in enumerate(hidden):
        wh_p = wh_p.at[i, :H, :H].set(w.astype(jnp.bfloat16))
        b_p = b_p.at[i + 1, :H].set(b.reshape(-1))
    w7_p = jnp.zeros((H_pad, OUT_W), jnp.bfloat16).at[:H, :1].set(w7.astype(jnp.bfloat16))
    b_p = b_p.at[6, :1].set(b7.reshape(-1))
    return w1_p, wh_p, b_p, w7_p


def mlp_forward(x, packed):
    """x: [B, C, H, W] float32. packed: output of pack_params."""
    w1_p, wh_p, b_p, w7_p = packed
    D_pad, H_pad = w1_p.shape
    B = x.shape[0]
    x_flat = x.reshape(B, -1)
    D = x_flat.shape[1]

    # --- batch tiling: balanced tiles, >= 2 grid steps for moderate B (v7x has 2 TCs) ---
    num_tiles = pl.cdiv(B, TB_MAX)
    if num_tiles == 1 and B > 2 * TB_MIN:
        num_tiles = 2
    TB = _round_up(pl.cdiv(B, num_tiles), TB_MIN)
    grid_n = pl.cdiv(B, TB)

    if D == D_pad and B % TB_MIN == 0:
        # No padded copy: only the (half-size) bf16 cast. A ragged last tile (if any) is
        # handled by Pallas boundary masking; padded rows only affect discarded output rows.
        x_in = x_flat.astype(jnp.bfloat16)
        B_out = B
    else:
        # Fused cast + zero-pad (half the bytes of the old f32 pad). Zero D-pad columns are
        # required so padded lanes never contribute garbage to real rows.
        B_out = grid_n * TB
        x_in = (jnp.zeros((B_out, D_pad), jnp.bfloat16)
                .at[:B, :D].set(x_flat.astype(jnp.bfloat16)))

    out = pl.pallas_call(
        mlp_kernel,
        out_shape=jax.ShapeDtypeStruct((B_out, OUT_W), jnp.bfloat16),
        grid_spec=pltpu.PrefetchScalarGridSpec(
            num_scalar_prefetch=0,
            grid=(grid_n,),
            in_specs=[
                pl.BlockSpec((TB, D_pad), lambda i: (i, 0)),           # x: batch-tiled
                pl.BlockSpec((D_pad, H_pad), lambda i: (0, 0)),        # w1: VMEM-resident
                pl.BlockSpec((5, H_pad, H_pad), lambda i: (0, 0, 0)),  # stacked hidden weights
                pl.BlockSpec((8, H_pad), lambda i: (0, 0)),            # all 7 biases, one slab
                pl.BlockSpec((H_pad, OUT_W), lambda i: (0, 0)),        # w7
            ],
            out_specs=pl.BlockSpec((TB, OUT_W), lambda i: (i, 0)),
        ),
        compiler_params=pltpu.CompilerParams(
            dimension_semantics=("parallel",),
        ),
    )(x_in, w1_p, wh_p, b_p, w7_p)

    # Strip batch padding and the lane padding of the final Linear(., 1).
    return out[:B, :1].astype(jnp.float32)


mlp_forward_jit = jax.jit(mlp_forward)


def init_params(key, input_size, hidden_dim):
    """Deterministic init mimicking nn.Linear's U(-1/sqrt(fan_in), 1/sqrt(fan_in))."""
    dims = [(input_size, hidden_dim)] + [(hidden_dim, hidden_dim)] * 5 + [(hidden_dim, 1)]
    params = []
    for din, dout in dims:
        key, kw, kb = jax.random.split(key, 3)
        bound = 1.0 / (din ** 0.5)
        w = jax.random.uniform(kw, (din, dout), jnp.float32, -bound, bound)
        b = jax.random.uniform(kb, (1, dout), jnp.float32, -bound, bound)
        params.append((w, b))
    return params


def reference_forward(x, params):
    """Pure-JAX (f32) reference of the PyTorch forward, for sanity checking."""
    h = x.reshape(x.shape[0], -1)
    for i, (w, b) in enumerate(params):
        h = h @ w + b
        if i < len(params) - 1:
            h = jnp.where(h > 0, h, LEAKY_SLOPE * h)
    return h


if __name__ == "__main__":
    key = jax.random.PRNGKey(0)
    k_x, k_p, k_x2 = jax.random.split(key, 3)

    B, C, H, W = 2, 4, 16, 16
    hidden_dim = 32
    input_size = C * H * W

    params = init_params(k_p, input_size, hidden_dim)
    packed = pack_params(params)          # packed once, outside the per-call path

    # Primary small test (B=2): exercises the padded-batch path.
    x = jax.random.normal(k_x, (B, C, H, W), dtype=jnp.float32)
    out = jax.block_until_ready(mlp_forward_jit(x, packed))
    ref = reference_forward(x, params)
    assert out.shape == (B, 1), out.shape
    # bf16 matmul path -> looser tolerance than the pure-f32 original.
    assert jnp.allclose(out, ref, atol=5e-2, rtol=5e-2), (out, ref)

    # Secondary test (B=48): exercises the copy-free path with a ragged last tile and a
    # 2-step grid (keeps both v7x TensorCores busy).
    B2 = 48
    x2 = jax.random.normal(k_x2, (B2, C, H, W), dtype=jnp.float32)
    out2 = jax.block_until_ready(mlp_forward_jit(x2, packed))
    ref2 = reference_forward(x2, params)
    assert out2.shape == (B2, 1), out2.shape
    assert jnp.allclose(out2, ref2, atol=5e-2, rtol=5e-2), (out2, ref2)

    print("KERNEL_OK")
</pallas_src>

<mosaic_0001>
module attributes {stable_mosaic.version = 11 : i64} {
  func.func @mlp_kernel(%arg0: i32, %arg1: memref<16x1024xbf16, #tpu.memory_space<vmem>>, %arg2: memref<1024x128xbf16, #tpu.memory_space<vmem>>, %arg3: memref<5x128x128xbf16, #tpu.memory_space<vmem>>, %arg4: memref<8x128xf32, #tpu.memory_space<vmem>>, %arg5: memref<128x128xbf16, #tpu.memory_space<vmem>>, %arg6: memref<16x128xbf16, #tpu.memory_space<vmem>>) attributes {dimension_semantics = [#tpu.dimension_semantics<parallel>], iteration_bounds = array<i64: 1>, scalar_prefetch = 0 : i64, scratch_operands = 0 : i64, tpu.core_type = #tpu.core_type<tc>, window_params = [{transform_indices = @transform_0, window_bounds = array<i64: 16, 1024>}, {pipeline_mode = #tpu.pipeline_mode<synchronous>, transform_indices = @transform_1, window_bounds = array<i64: 1024, 128>}, {pipeline_mode = #tpu.pipeline_mode<synchronous>, transform_indices = @transform_2, window_bounds = array<i64: 5, 128, 128>}, {pipeline_mode = #tpu.pipeline_mode<synchronous>, transform_indices = @transform_3, window_bounds = array<i64: 8, 128>}, {pipeline_mode = #tpu.pipeline_mode<synchronous>, transform_indices = @transform_4, window_bounds = array<i64: 128, 128>}, {transform_indices = @transform_5, window_bounds = array<i64: 16, 128>}]} {
    %c0 = arith.constant 0 : index
    %c0_0 = arith.constant 0 : index
    %0 = vector.load %arg1[%c0, %c0_0] : memref<16x1024xbf16, #tpu.memory_space<vmem>>, vector<16x1024xbf16>
    %c0_1 = arith.constant 0 : index
    %c0_2 = arith.constant 0 : index
    %1 = vector.load %arg2[%c0_1, %c0_2] : memref<1024x128xbf16, #tpu.memory_space<vmem>>, vector<1024x128xbf16>
    %cst = arith.constant dense<0.000000e+00> : vector<16x128xf32>
    %2 = tpu.matmul %0, %1, %cst {dimension_numbers = #tpu.dot_dimension_numbers<[1], [0], [0], [1], [0, 0, 1, 1], [], []>} : vector<16x1024xbf16>, vector<1024x128xbf16>, vector<16x128xf32> -> vector<16x128xf32>
    %c0_3 = arith.constant 0 : index
    %c0_4 = arith.constant 0 : index
    %3 = vector.load %arg4[%c0_3, %c0_4] : memref<8x128xf32, #tpu.memory_space<vmem>>, vector<1x128xf32>
    %4 = vector.broadcast %3 : vector<1x128xf32> to vector<16x128xf32>
    %5 = arith.addf %2, %4 : vector<16x128xf32>
    %cst_5 = arith.constant 0.000000e+00 : f32
    %6 = vector.broadcast %cst_5 : f32 to vector<16x128xf32>
    %7 = arith.cmpf ogt, %5, %6 : vector<16x128xf32>
    %cst_6 = arith.constant 0.00999999977 : f32
    %8 = vector.broadcast %cst_6 : f32 to vector<16x128xf32>
    %9 = arith.mulf %8, %5 : vector<16x128xf32>
    %10 = arith.select %7, %5, %9 : vector<16x128xi1>, vector<16x128xf32>
    %11 = arith.truncf %10 : vector<16x128xf32> to vector<16x128xbf16>
    %c0_7 = arith.constant 0 : index
    %c0_8 = arith.constant 0 : index
    %c0_9 = arith.constant 0 : index
    %12 = vector.load %arg3[%c0_7, %c0_8, %c0_9] : memref<5x128x128xbf16, #tpu.memory_space<vmem>>, vector<1x128x128xbf16>
    %13 = vector.shape_cast %12 : vector<1x128x128xbf16> to vector<128x128xbf16>
    %cst_10 = arith.constant dense<0.000000e+00> : vector<16x128xf32>
    %14 = tpu.matmul %11, %13, %cst_10 {dimension_numbers = #tpu.dot_dimension_numbers<[1], [0], [0], [1], [0, 0, 1, 1], [], []>} : vector<16x128xbf16>, vector<128x128xbf16>, vector<16x128xf32> -> vector<16x128xf32>
    %c1 = arith.constant 1 : index
    %c0_11 = arith.constant 0 : index
    %15 = vector.load %arg4[%c1, %c0_11] : memref<8x128xf32, #tpu.memory_space<vmem>>, vector<1x128xf32>
    %16 = vector.broadcast %15 : vector<1x128xf32> to vector<16x128xf32>
    %17 = arith.addf %14, %16 : vector<16x128xf32>
    %cst_12 = arith.constant 0.000000e+00 : f32
    %18 = vector.broadcast %cst_12 : f32 to vector<16x128xf32>
    %19 = arith.cmpf ogt, %17, %18 : vector<16x128xf32>
    %cst_13 = arith.constant 0.00999999977 : f32
    %20 = vector.broadcast %cst_13 : f32 to vector<16x128xf32>
    %21 = arith.mulf %20, %17 : vector<16x128xf32>
    %22 = arith.select %19, %17, %21 : vector<16x128xi1>, vector<16x128xf32>
    %23 = arith.truncf %22 : vector<16x128xf32> to vector<16x128xbf16>
    %c1_14 = arith.constant 1 : index
    %c0_15 = arith.constant 0 : index
    %c0_16 = arith.constant 0 : index
    %24 = vector.load %arg3[%c1_14, %c0_15, %c0_16] : memref<5x128x128xbf16, #tpu.memory_space<vmem>>, vector<1x128x128xbf16>
    %25 = vector.shape_cast %24 : vector<1x128x128xbf16> to vector<128x128xbf16>
    %cst_17 = arith.constant dense<0.000000e+00> : vector<16x128xf32>
    %26 = tpu.matmul %23, %25, %cst_17 {dimension_numbers = #tpu.dot_dimension_numbers<[1], [0], [0], [1], [0, 0, 1, 1], [], []>} : vector<16x128xbf16>, vector<128x128xbf16>, vector<16x128xf32> -> vector<16x128xf32>
    %c2 = arith.constant 2 : index
    %c0_18 = arith.constant 0 : index
    %27 = vector.load %arg4[%c2, %c0_18] : memref<8x128xf32, #tpu.memory_space<vmem>>, vector<1x128xf32>
    %28 = vector.broadcast %27 : vector<1x128xf32> to vector<16x128xf32>
    %29 = arith.addf %26, %28 : vector<16x128xf32>
    %cst_19 = arith.constant 0.000000e+00 : f32
    %30 = vector.broadcast %cst_19 : f32 to vector<16x128xf32>
    %31 = arith.cmpf ogt, %29, %30 : vector<16x128xf32>
    %cst_20 = arith.constant 0.00999999977 : f32
    %32 = vector.broadcast %cst_20 : f32 to vector<16x128xf32>
    %33 = arith.mulf %32, %29 : vector<16x128xf32>
    %34 = arith.select %31, %29, %33 : vector<16x128xi1>, vector<16x128xf32>
    %35 = arith.truncf %34 : vector<16x128xf32> to vector<16x128xbf16>
    %c2_21 = arith.constant 2 : index
    %c0_22 = arith.constant 0 : index
    %c0_23 = arith.constant 0 : index
    %36 = vector.load %arg3[%c2_21, %c0_22, %c0_23] : memref<5x128x128xbf16, #tpu.memory_space<vmem>>, vector<1x128x128xbf16>
    %37 = vector.shape_cast %36 : vector<1x128x128xbf16> to vector<128x128xbf16>
    %cst_24 = arith.constant dense<0.000000e+00> : vector<16x128xf32>
    %38 = tpu.matmul %35, %37, %cst_24 {dimension_numbers = #tpu.dot_dimension_numbers<[1], [0], [0], [1], [0, 0, 1, 1], [], []>} : vector<16x128xbf16>, vector<128x128xbf16>, vector<16x128xf32> -> vector<16x128xf32>
    %c3 = arith.constant 3 : index
    %c0_25 = arith.constant 0 : index
    %39 = vector.load %arg4[%c3, %c0_25] : memref<8x128xf32, #tpu.memory_space<vmem>>, vector<1x128xf32>
    %40 = vector.broadcast %39 : vector<1x128xf32> to vector<16x128xf32>
    %41 = arith.addf %38, %40 : vector<16x128xf32>
    %cst_26 = arith.constant 0.000000e+00 : f32
    %42 = vector.broadcast %cst_26 : f32 to vector<16x128xf32>
    %43 = arith.cmpf ogt, %41, %42 : vector<16x128xf32>
    %cst_27 = arith.constant 0.00999999977 : f32
    %44 = vector.broadcast %cst_27 : f32 to vector<16x128xf32>
    %45 = arith.mulf %44, %41 : vector<16x128xf32>
    %46 = arith.select %43, %41, %45 : vector<16x128xi1>, vector<16x128xf32>
    %47 = arith.truncf %46 : vector<16x128xf32> to vector<16x128xbf16>
    %c3_28 = arith.constant 3 : index
    %c0_29 = arith.constant 0 : index
    %c0_30 = arith.constant 0 : index
    %48 = vector.load %arg3[%c3_28, %c0_29, %c0_30] : memref<5x128x128xbf16, #tpu.memory_space<vmem>>, vector<1x128x128xbf16>
    %49 = vector.shape_cast %48 : vector<1x128x128xbf16> to vector<128x128xbf16>
    %cst_31 = arith.constant dense<0.000000e+00> : vector<16x128xf32>
    %50 = tpu.matmul %47, %49, %cst_31 {dimension_numbers = #tpu.dot_dimension_numbers<[1], [0], [0], [1], [0, 0, 1, 1], [], []>} : vector<16x128xbf16>, vector<128x128xbf16>, vector<16x128xf32> -> vector<16x128xf32>
    %c4 = arith.constant 4 : index
    %c0_32 = arith.constant 0 : index
    %51 = vector.load %arg4[%c4, %c0_32] : memref<8x128xf32, #tpu.memory_space<vmem>>, vector<1x128xf32>
    %52 = vector.broadcast %51 : vector<1x128xf32> to vector<16x128xf32>
    %53 = arith.addf %50, %52 : vector<16x128xf32>
    %cst_33 = arith.constant 0.000000e+00 : f32
    %54 = vector.broadcast %cst_33 : f32 to vector<16x128xf32>
    %55 = arith.cmpf ogt, %53, %54 : vector<16x128xf32>
    %cst_34 = arith.constant 0.00999999977 : f32
    %56 = vector.broadcast %cst_34 : f32 to vector<16x128xf32>
    %57 = arith.mulf %56, %53 : vector<16x128xf32>
    %58 = arith.select %55, %53, %57 : vector<16x128xi1>, vector<16x128xf32>
    %59 = arith.truncf %58 : vector<16x128xf32> to vector<16x128xbf16>
    %c4_35 = arith.constant 4 : index
    %c0_36 = arith.constant 0 : index
    %c0_37 = arith.constant 0 : index
    %60 = vector.load %arg3[%c4_35, %c0_36, %c0_37] : memref<5x128x128xbf16, #tpu.memory_space<vmem>>, vector<1x128x128xbf16>
    %61 = vector.shape_cast %60 : vector<1x128x128xbf16> to vector<128x128xbf16>
    %cst_38 = arith.constant dense<0.000000e+00> : vector<16x128xf32>
    %62 = tpu.matmul %59, %61, %cst_38 {dimension_numbers = #tpu.dot_dimension_numbers<[1], [0], [0], [1], [0, 0, 1, 1], [], []>} : vector<16x128xbf16>, vector<128x128xbf16>, vector<16x128xf32> -> vector<16x128xf32>
    %c5 = arith.constant 5 : index
    %c0_39 = arith.constant 0 : index
    %63 = vector.load %arg4[%c5, %c0_39] : memref<8x128xf32, #tpu.memory_space<vmem>>, vector<1x128xf32>
    %64 = vector.broadcast %63 : vector<1x128xf32> to vector<16x128xf32>
    %65 = arith.addf %62, %64 : vector<16x128xf32>
    %cst_40 = arith.constant 0.000000e+00 : f32
    %66 = vector.broadcast %cst_40 : f32 to vector<16x128xf32>
    %67 = arith.cmpf ogt, %65, %66 : vector<16x128xf32>
    %cst_41 = arith.constant 0.00999999977 : f32
    %68 = vector.broadcast %cst_41 : f32 to vector<16x128xf32>
    %69 = arith.mulf %68, %65 : vector<16x128xf32>
    %70 = arith.select %67, %65, %69 : vector<16x128xi1>, vector<16x128xf32>
    %71 = arith.truncf %70 : vector<16x128xf32> to vector<16x128xbf16>
    %c0_42 = arith.constant 0 : index
    %c0_43 = arith.constant 0 : index
    %72 = vector.load %arg5[%c0_42, %c0_43] : memref<128x128xbf16, #tpu.memory_space<vmem>>, vector<128x128xbf16>
    %cst_44 = arith.constant dense<0.000000e+00> : vector<16x128xf32>
    %73 = tpu.matmul %71, %72, %cst_44 {dimension_numbers = #tpu.dot_dimension_numbers<[1], [0], [0], [1], [0, 0, 1, 1], [], []>} : vector<16x128xbf16>, vector<128x128xbf16>, vector<16x128xf32> -> vector<16x128xf32>
    %c6 = arith.constant 6 : index
    %c0_45 = arith.constant 0 : index
    %74 = vector.load %arg4[%c6, %c0_45] : memref<8x128xf32, #tpu.memory_space<vmem>>, vector<1x128xf32>
    %75 = vector.broadcast %74 : vector<1x128xf32> to vector<16x128xf32>
    %76 = arith.addf %73, %75 : vector<16x128xf32>
    %77 = arith.truncf %76 : vector<16x128xf32> to vector<16x128xbf16>
    %c0_46 = arith.constant 0 : index
    %c0_47 = arith.constant 0 : index
    %78 = vector.load %arg6[%c0_46, %c0_47] : memref<16x128xbf16, #tpu.memory_space<vmem>>, vector<16x128xbf16>
    tpu.vector_store %arg6[%c0_46, %c0_47], %77 {strides = array<i32>} : memref<16x128xbf16, #tpu.memory_space<vmem>>, vector<16x128xbf16>,
    return
  }
  func.func @transform_0(%arg0: i32) -> (i32, i32) {
    %c0_i32 = arith.constant 0 : i32
    %c0_i32_0 = arith.constant 0 : i32
    return %arg0, %c0_i32 : i32, i32
  }
  func.func @transform_1(%arg0: i32) -> (i32, i32) {
    %c0_i32 = arith.constant 0 : i32
    %c0_i32_0 = arith.constant 0 : i32
    %c0_i32_1 = arith.constant 0 : i32
    return %c0_i32, %c0_i32_0 : i32, i32
  }
  func.func @transform_2(%arg0: i32) -> (i32, i32, i32) {
    %c0_i32 = arith.constant 0 : i32
    %c0_i32_0 = arith.constant 0 : i32
    %c0_i32_1 = arith.constant 0 : i32
    %c0_i32_2 = arith.constant 0 : i32
    return %c0_i32, %c0_i32_0, %c0_i32_1 : i32, i32, i32
  }
  func.func @transform_3(%arg0: i32) -> (i32, i32) {
    %c0_i32 = arith.constant 0 : i32
    %c0_i32_0 = arith.constant 0 : i32
    %c0_i32_1 = arith.constant 0 : i32
    return %c0_i32, %c0_i32_0 : i32, i32
  }
  func.func @transform_4(%arg0: i32) -> (i32, i32) {
    %c0_i32 = arith.constant 0 : i32
    %c0_i32_0 = arith.constant 0 : i32
    %c0_i32_1 = arith.constant 0 : i32
    return %c0_i32, %c0_i32_0 : i32, i32
  }
  func.func @transform_5(%arg0: i32) -> (i32, i32) {
    %c0_i32 = arith.constant 0 : i32
    %c0_i32_0 = arith.constant 0 : i32
    return %arg0, %c0_i32 : i32, i32
  }
}

</mosaic_0001>

<llo_original>
// kernel: mlp_forward.1
$region0: #{mlp_forward.1}
  #allocation0 [shape = 'u32[]', space=smem, size = 0x4, offset = 0x4, fixed_abs, tag = 'smem constant byte address 0x4 - core index']
  #allocation1 [shape = 'u32[72,128]{1,0:T(1,128)}', space=vmem, size = 0x9000, scoped, tag = 'internal scratch']
  %s0 = inlined_call_operand.vmem [shape: bf16[16,1024], index: 0, kind: input, shape index: {}]
  %s1 = inlined_call_operand.hbm [shape: bf16[1024,128], index: 1, kind: input, shape index: {}]
  %s2 = inlined_call_operand.vmem [shape: bf16[5,128,128], index: 2, kind: input, shape index: {}]
  %s3 = inlined_call_operand.vmem [shape: f32[8,128], index: 3, kind: input, shape index: {}]
  %s4 = inlined_call_operand.hbm [shape: bf16[128,128], index: 4, kind: input, shape index: {}]
  %s5 = inlined_call_operand.vmem [shape: bf16[16,128], index: 5, kind: output, shape index: {}]
  %s6 = sld [smem:[#allocation0]]
  $region38: #{mlp_forward.1} parent=0
    _
  %s8 = ssub.s32 1, %s6
  %s9 = scalar_select 0, %s8, %s6
  $region1: #{mlp_forward.1} parent=0
    #allocation2 [shape = 'u8[262144]{0}', space=vmem, size = 0x40000, scoped, tag = 'input window, operand 1, single buffered']
    #allocation3 [shape = 's32[1]{0}', space=sflag, size = 0x4, scoped, tag = 'scoped memory for mlp_forward.1']
    #allocation4 [shape = 'u8[32768]{0}', space=vmem, size = 0x8000, scoped, tag = 'input window, operand 4, single buffered']
    #allocation5 [shape = 's32[1]{0}', space=sflag, size = 0x4, scoped, tag = 'scoped memory for mlp_forward.1']
    %10 = vsyncpa [#allocation3], 0
    %11 = vsyncpa [#allocation5], 0
    // Predicated region
    $region2: #{mlp_forward.1} parent=1 // pred_check
      _
    $region3: #{mlp_forward.1} parent=1 // pred_check_branch
      %13 = sbr.rel (0) target = $region5
    $region4: #{mlp_forward.1} parent=1 // pred_region
      _
    $region5: #{mlp_forward.1} parent=1 // pred_fallthru
      _
    // Predicated region
    $region6: #{mlp_forward.1} parent=1 // pred_check
      _
    $region7: #{mlp_forward.1} parent=1 // pred_check_branch
      %15 = sbr.rel (0) target = $region9
    $region8: #{mlp_forward.1} parent=1 // pred_region
      %17 = vsyncadd [#allocation3], 0
      %s18 = sshll.u32 %s1, 4
      %s19 = int_to_ptr.hbm [resolvable:$true] %s18
      %s20 = sshll.u32 [#allocation2], 4
      %s21 = int_to_ptr.vmem [resolvable:$true] %s20
      %26 = dma.hbm_to_vmem [thread:$0]  %s19, 8192, %s21, [#allocation3], 64, 64, 4
    $region9: #{mlp_forward.1} parent=1 // pred_fallthru
      _
    // Predicated region
    $region10: #{mlp_forward.1} parent=1 // pred_check
      _
    $region11: #{mlp_forward.1} parent=1 // pred_check_branch
      %28 = sbr.rel (0) target = $region13
    $region12: #{mlp_forward.1} parent=1 // pred_region
      _
    $region13: #{mlp_forward.1} parent=1 // pred_fallthru
      _
    // Predicated region
    $region14: #{mlp_forward.1} parent=1 // pred_check
      _
    $region15: #{mlp_forward.1} parent=1 // pred_check_branch
      %30 = sbr.rel (0) target = $region17
    $region16: #{mlp_forward.1} parent=1 // pred_region
      _
    $region17: #{mlp_forward.1} parent=1 // pred_fallthru
      _
    // Predicated region
    $region18: #{mlp_forward.1} parent=1 // pred_check
      _
    $region19: #{mlp_forward.1} parent=1 // pred_check_branch
      %32 = sbr.rel (0) target = $region21
    $region20: #{mlp_forward.1} parent=1 // pred_region
      %34 = vsyncadd [#allocation5], 0
      %s35 = sshll.u32 %s4, 4
      %s36 = int_to_ptr.hbm [resolvable:$true] %s35
      %s37 = sshll.u32 [#allocation4], 4
      %s38 = int_to_ptr.vmem [resolvable:$true] %s37
      %43 = dma.hbm_to_vmem [thread:$0]  %s36, 1024, %s38, [#allocation5], 64, 64, 4
    $region21: #{mlp_forward.1} parent=1 // pred_fallthru
      _
    // Predicated region
    $region22: #{mlp_forward.1} parent=1 // pred_check
      _
    $region23: #{mlp_forward.1} parent=1 // pred_check_branch
      %45 = sbr.rel (0) target = $region25
    $region24: #{mlp_forward.1} parent=1 // pred_region
      %47 = dma.done [#allocation3], 8192
    $region25: #{mlp_forward.1} parent=1 // pred_fallthru
      _
    // Predicated region
    $region26: #{mlp_forward.1} parent=1 // pred_check
      _
    $region27: #{mlp_forward.1} parent=1 // pred_check_branch
      %49 = sbr.rel (0) target = $region29
    $region28: #{mlp_forward.1} parent=1 // pred_region
      %51 = dma.done [#allocation5], 1024
    $region29: #{mlp_forward.1} parent=1 // pred_fallthru
      _
    %v52 = vld [vmem:[%s0] sm:$0xff]
    %v53 = vld [vmem:[%s0 + $0x8] sm:$0xff]
    %v54 = vld [vmem:[%s0 + $0x10] sm:$0xff]
    %v55 = vld [vmem:[%s0 + $0x18] sm:$0xff]
    %v56 = vld [vmem:[%s0 + $0x20] sm:$0xff]
    %v57 = vld [vmem:[%s0 + $0x28] sm:$0xff]
    %v58 = vld [vmem:[%s0 + $0x30] sm:$0xff]
    %v59 = vld [vmem:[%s0 + $0x38] sm:$0xff]
    %v60 = vld [vmem:[#allocation2] sm:$0xf]
    %v61 = vld [vmem:[#allocation2 + $0x4] sm:$0xf]
    %v62 = vld [vmem:[#allocation2 + $0x8] sm:$0xf]
    %v63 = vld [vmem:[#allocation2 + $0xc] sm:$0xf]
    %v64 = vld [vmem:[#allocation2 + $0x10] sm:$0xf]
    %v65 = vld [vmem:[#allocation2 + $0x14] sm:$0xf]
    %v66 = vld [vmem:[#allocation2 + $0x18] sm:$0xf]
    %v67 = vld [vmem:[#allocation2 + $0x1c] sm:$0xf]
    %v68 = vld [vmem:[#allocation2 + $0x20] sm:$0xf]
    %v69 = vld [vmem:[#allocation2 + $0x24] sm:$0xf]
    %v70 = vld [vmem:[#allocation2 + $0x28] sm:$0xf]
    %v71 = vld [vmem:[#allocation2 + $0x2c] sm:$0xf]
    %v72 = vld [vmem:[#allocation2 + $0x30] sm:$0xf]
    %v73 = vld [vmem:[#allocation2 + $0x34] sm:$0xf]
    %v74 = vld [vmem:[#allocation2 + $0x38] sm:$0xf]
    %v75 = vld [vmem:[#allocation2 + $0x3c] sm:$0xf]
    %v76 = vld [vmem:[#allocation2 + $0x40] sm:$0xf]
    %v77 = vld [vmem:[#allocation2 + $0x44] sm:$0xf]
    %v78 = vld [vmem:[#allocation2 + $0x48] sm:$0xf]
    %v79 = vld [vmem:[#allocation2 + $0x4c] sm:$0xf]
    %v80 = vld [vmem:[#allocation2 + $0x50] sm:$0xf]
    %v81 = vld [vmem:[#allocation2 + $0x54] sm:$0xf]
    %v82 = vld [vmem:[#allocation2 + $0x58] sm:$0xf]
    %v83 = vld [vmem:[#allocation2 + $0x5c] sm:$0xf]
    %v84 = vld [vmem:[#allocation2 + $0x60] sm:$0xf]
    %v85 = vld [vmem:[#allocation2 + $0x64] sm:$0xf]
    %v86 = vld [vmem:[#allocation2 + $0x68] sm:$0xf]
    %v87 = vld [vmem:[#allocation2 + $0x6c] sm:$0xf]
    %v88 = vld [vmem:[#allocation2 + $0x70] sm:$0xf]
    %v89 = vld [vmem:[#allocation2 + $0x74] sm:$0xf]
    %v90 = vld [vmem:[#allocation2 + $0x78] sm:$0xf]
    %v91 = vld [vmem:[#allocation2 + $0x7c] sm:$0xf]
    %v92 = vld [vmem:[#allocation2 + $0x80] sm:$0xf]
    %v93 = vld [vmem:[#allocation2 + $0x84] sm:$0xf]
    %v94 = vld [vmem:[#allocation2 + $0x88] sm:$0xf]
    %v95 = vld [vmem:[#allocation2 + $0x8c] sm:$0xf]
    %v96 = vld [vmem:[#allocation2 + $0x90] sm:$0xf]
    %v97 = vld [vmem:[#allocation2 + $0x94] sm:$0xf]
    %v98 = vld [vmem:[#allocation2 + $0x98] sm:$0xf]
    %v99 = vld [vmem:[#allocation2 + $0x9c] sm:$0xf]
    %v100 = vld [vmem:[#allocation2 + $0xa0] sm:$0xf]
    %v101 = vld [vmem:[#allocation2 + $0xa4] sm:$0xf]
    %v102 = vld [vmem:[#allocation2 + $0xa8] sm:$0xf]
    %v103 = vld [vmem:[#allocation2 + $0xac] sm:$0xf]
    %v104 = vld [vmem:[#allocation2 + $0xb0] sm:$0xf]
    %v105 = vld [vmem:[#allocation2 + $0xb4] sm:$0xf]
    %v106 = vld [vmem:[#allocation2 + $0xb8] sm:$0xf]
    %v107 = vld [vmem:[#allocation2 + $0xbc] sm:$0xf]
    %v108 = vld [vmem:[#allocation2 + $0xc0] sm:$0xf]
    %v109 = vld [vmem:[#allocation2 + $0xc4] sm:$0xf]
    %v110 = vld [vmem:[#allocation2 + $0xc8] sm:$0xf]
    %v111 = vld [vmem:[#allocation2 + $0xcc] sm:$0xf]
    %v112 = vld [vmem:[#allocation2 + $0xd0] sm:$0xf]
    %v113 = vld [vmem:[#allocation2 + $0xd4] sm:$0xf]
    %v114 = vld [vmem:[#allocation2 + $0xd8] sm:$0xf]
    %v115 = vld [vmem:[#allocation2 + $0xdc] sm:$0xf]
    %v116 = vld [vmem:[#allocation2 + $0xe0] sm:$0xf]
    %v117 = vld [vmem:[#allocation2 + $0xe4] sm:$0xf]
    %v118 = vld [vmem:[#allocation2 + $0xe8] sm:$0xf]
    %v119 = vld [vmem:[#allocation2 + $0xec] sm:$0xf]
    %v120 = vld [vmem:[#allocation2 + $0xf0] sm:$0xf]
    %v121 = vld [vmem:[#allocation2 + $0xf4] sm:$0xf]
    %v122 = vld [vmem:[#allocation2 + $0xf8] sm:$0xf]
    %v123 = vld [vmem:[#allocation2 + $0xfc] sm:$0xf]
    %v124 = vld [vmem:[#allocation2 + $0x100] sm:$0xf]
    %v125 = vld [vmem:[#allocation2 + $0x104] sm:$0xf]
    %v126 = vld [vmem:[#allocation2 + $0x108] sm:$0xf]
    %v127 = vld [vmem:[#allocation2 + $0x10c] sm:$0xf]
    %v128 = vld [vmem:[#allocation2 + $0x110] sm:$0xf]
    %v129 = vld [vmem:[#allocation2 + $0x114] sm:$0xf]
    %v130 = vld [vmem:[#allocation2 + $0x118] sm:$0xf]
    %v131 = vld [vmem:[#allocation2 + $0x11c] sm:$0xf]
    %v132 = vld [vmem:[#allocation2 + $0x120] sm:$0xf]
    %v133 = vld [vmem:[#allocation2 + $0x124] sm:$0xf]
    %v134 = vld [vmem:[#allocation2 + $0x128] sm:$0xf]
    %v135 = vld [vmem:[#allocation2 + $0x12c] sm:$0xf]
    %v136 = vld [vmem:[#allocation2 + $0x130] sm:$0xf]
    %v137 = vld [vmem:[#allocation2 + $0x134] sm:$0xf]
    %v138 = vld [vmem:[#allocation2 + $0x138] sm:$0xf]
    %v139 = vld [vmem:[#allocation2 + $0x13c] sm:$0xf]
    %v140 = vld [vmem:[#allocation2 + $0x140] sm:$0xf]
    %v141 = vld [vmem:[#allocation2 + $0x144] sm:$0xf]
    %v142 = vld [vmem:[#allocation2 + $0x148] sm:$0xf]
    %v143 = vld [vmem:[#allocation2 + $0x14c] sm:$0xf]
    %v144 = vld [vmem:[#allocation2 + $0x150] sm:$0xf]
    %v145 = vld [vmem:[#allocation2 + $0x154] sm:$0xf]
    %v146 = vld [vmem:[#allocation2 + $0x158] sm:$0xf]
    %v147 = vld [vmem:[#allocation2 + $0x15c] sm:$0xf]
    %v148 = vld [vmem:[#allocation2 + $0x160] sm:$0xf]
    %v149 = vld [vmem:[#allocation2 + $0x164] sm:$0xf]
    %v150 = vld [vmem:[#allocation2 + $0x168] sm:$0xf]
    %v151 = vld [vmem:[#allocation2 + $0x16c] sm:$0xf]
    %v152 = vld [vmem:[#allocation2 + $0x170] sm:$0xf]
    %v153 = vld [vmem:[#allocation2 + $0x174] sm:$0xf]
    %v154 = vld [vmem:[#allocation2 + $0x178] sm:$0xf]
    %v155 = vld [vmem:[#allocation2 + $0x17c] sm:$0xf]
    %v156 = vld [vmem:[#allocation2 + $0x180] sm:$0xf]
    %v157 = vld [vmem:[#allocation2 + $0x184] sm:$0xf]
    %v158 = vld [vmem:[#allocation2 + $0x188] sm:$0xf]
    %v159 = vld [vmem:[#allocation2 + $0x18c] sm:$0xf]
    %v160 = vld [vmem:[#allocation2 + $0x190] sm:$0xf]
    %v161 = vld [vmem:[#allocation2 + $0x194] sm:$0xf]
    %v162 = vld [vmem:[#allocation2 + $0x198] sm:$0xf]
    %v163 = vld [vmem:[#allocation2 + $0x19c] sm:$0xf]
    %v164 = vld [vmem:[#allocation2 + $0x1a0] sm:$0xf]
    %v165 = vld [vmem:[#allocation2 + $0x1a4] sm:$0xf]
    %v166 = vld [vmem:[#allocation2 + $0x1a8] sm:$0xf]
    %v167 = vld [vmem:[#allocation2 + $0x1ac] sm:$0xf]
    %v168 = vld [vmem:[#allocation2 + $0x1b0] sm:$0xf]
    %v169 = vld [vmem:[#allocation2 + $0x1b4] sm:$0xf]
    %v170 = vld [vmem:[#allocation2 + $0x1b8] sm:$0xf]
    %v171 = vld [vmem:[#allocation2 + $0x1bc] sm:$0xf]
    %v172 = vld [vmem:[#allocation2 + $0x1c0] sm:$0xf]
    %v173 = vld [vmem:[#allocation2 + $0x1c4] sm:$0xf]
    %v174 = vld [vmem:[#allocation2 + $0x1c8] sm:$0xf]
    %v175 = vld [vmem:[#allocation2 + $0x1cc] sm:$0xf]
    %v176 = vld [vmem:[#allocation2 + $0x1d0] sm:$0xf]
    %v177 = vld [vmem:[#allocation2 + $0x1d4] sm:$0xf]
    %v178 = vld [vmem:[#allocation2 + $0x1d8] sm:$0xf]
    %v179 = vld [vmem:[#allocation2 + $0x1dc] sm:$0xf]
    %v180 = vld [vmem:[#allocation2 + $0x1e0] sm:$0xf]
    %v181 = vld [vmem:[#allocation2 + $0x1e4] sm:$0xf]
    %v182 = vld [vmem:[#allocation2 + $0x1e8] sm:$0xf]
    %v183 = vld [vmem:[#allocation2 + $0x1ec] sm:$0xf]
    %v184 = vld [vmem:[#allocation2 + $0x1f0] sm:$0xf]
    %v185 = vld [vmem:[#allocation2 + $0x1f4] sm:$0xf]
    %v186 = vld [vmem:[#allocation2 + $0x1f8] sm:$0xf]
    %v187 = vld [vmem:[#allocation2 + $0x1fc] sm:$0xf]
    %v188 = vld [vmem:[%s3] sm:$0x1]
    %v189 = vperm.slane %v188, 0
    %v198 = vunpack.c.l.b16 %v52
    %v199 = vunpack.c.h.b16 %v52
    %v200 = vunpack.c.l.b16 %v53
    %v201 = vunpack.c.h.b16 %v53
    %v202 = vunpack.c.l.b16 %v54
    %v203 = vunpack.c.h.b16 %v54
    %v204 = vunpack.c.l.b16 %v55
    %v205 = vunpack.c.h.b16 %v55
    %v206 = vunpack.c.l.b16 %v56
    %v207 = vunpack.c.h.b16 %v56
    %v208 = vunpack.c.l.b16 %v57
    %v209 = vunpack.c.h.b16 %v57
    %v210 = vunpack.c.l.b16 %v58
    %v211 = vunpack.c.h.b16 %v58
    %v212 = vunpack.c.l.b16 %v59
    %v213 = vunpack.c.h.b16 %v59
    %v214 = vpack.c.b16 %v206, %v198
    %v215 = vpack.c.b16 %v207, %v199
    %v216 = vpack.c.b16 %v208, %v200
    %v217 = vpack.c.b16 %v209, %v201
    %v218 = vpack.c.b16 %v210, %v202
    %v219 = vpack.c.b16 %v211, %v203
    %v220 = vpack.c.b16 %v212, %v204
    %v221 = vpack.c.b16 %v213, %v205
    %v358 = vunpack.c.l.b16 %v60
    %v359 = vunpack.c.l.b16 %v61
    %v360 = vunpack.c.l.b16 %v62
    %v361 = vunpack.c.l.b16 %v63
    %v362 = vunpack.c.l.b16 %v64
    %v363 = vunpack.c.l.b16 %v65
    %v364 = vunpack.c.l.b16 %v66
    %v365 = vunpack.c.l.b16 %v67
    %v366 = vunpack.c.l.b16 %v68
    %v367 = vunpack.c.l.b16 %v69
    %v368 = vunpack.c.l.b16 %v70
    %v369 = vunpack.c.l.b16 %v71
    %v370 = vunpack.c.l.b16 %v72
    %v371 = vunpack.c.l.b16 %v73
    %v372 = vunpack.c.l.b16 %v74
    %v373 = vunpack.c.l.b16 %v75
    %v374 = vunpack.c.l.b16 %v76
    %v375 = vunpack.c.l.b16 %v77
    %v376 = vunpack.c.l.b16 %v78
    %v377 = vunpack.c.l.b16 %v79
    %v378 = vunpack.c.l.b16 %v80
    %v379 = vunpack.c.l.b16 %v81
    %v380 = vunpack.c.l.b16 %v82
    %v381 = vunpack.c.l.b16 %v83
    %v382 = vunpack.c.l.b16 %v84
    %v383 = vunpack.c.l.b16 %v85
    %v384 = vunpack.c.l.b16 %v86
    %v385 = vunpack.c.l.b16 %v87
    %v386 = vunpack.c.l.b16 %v88
    %v387 = vunpack.c.l.b16 %v89
    %v388 = vunpack.c.l.b16 %v90
    %v389 = vunpack.c.l.b16 %v91
    %v390 = vunpack.c.l.b16 %v92
    %v391 = vunpack.c.l.b16 %v93
    %v392 = vunpack.c.l.b16 %v94
    %v393 = vunpack.c.l.b16 %v95
    %v394 = vunpack.c.l.b16 %v96
    %v395 = vunpack.c.l.b16 %v97
    %v396 = vunpack.c.l.b16 %v98
    %v397 = vunpack.c.l.b16 %v99
    %v398 = vunpack.c.l.b16 %v100
    %v399 = vunpack.c.l.b16 %v101
    %v400 = vunpack.c.l.b16 %v102
    %v401 = vunpack.c.l.b16 %v103
    %v402 = vunpack.c.l.b16 %v104
    %v403 = vunpack.c.l.b16 %v105
    %v404 = vunpack.c.l.b16 %v106
    %v405 = vunpack.c.l.b16 %v107
    %v406 = vunpack.c.l.b16 %v108
    %v407 = vunpack.c.l.b16 %v109
    %v408 = vunpack.c.l.b16 %v110
    %v409 = vunpack.c.l.b16 %v111
    %v410 = vunpack.c.l.b16 %v112
    %v411 = vunpack.c.l.b16 %v113
    %v412 = vunpack.c.l.b16 %v114
    %v413 = vunpack.c.l.b16 %v115
    %v414 = vunpack.c.l.b16 %v116
    %v415 = vunpack.c.l.b16 %v117
    %v416 = vunpack.c.l.b16 %v118
    %v417 = vunpack.c.l.b16 %v119
    %v418 = vunpack.c.l.b16 %v120
    %v419 = vunpack.c.l.b16 %v121
    %v420 = vunpack.c.l.b16 %v122
    %v421 = vunpack.c.l.b16 %v123
    %v422 = vunpack.c.l.b16 %v124
    %v423 = vunpack.c.l.b16 %v125
    %v424 = vunpack.c.l.b16 %v126
    %v425 = vunpack.c.l.b16 %v127
    %v426 = vunpack.c.l.b16 %v128
    %v427 = vunpack.c.l.b16 %v129
    %v428 = vunpack.c.l.b16 %v130
    %v429 = vunpack.c.l.b16 %v131
    %v430 = vunpack.c.l.b16 %v132
    %v431 = vunpack.c.l.b16 %v133
    %v432 = vunpack.c.l.b16 %v134
    %v433 = vunpack.c.l.b16 %v135
    %v434 = vunpack.c.l.b16 %v136
    %v435 = vunpack.c.l.b16 %v137
    %v436 = vunpack.c.l.b16 %v138
    %v437 = vunpack.c.l.b16 %v139
    %v438 = vunpack.c.l.b16 %v140
    %v439 = vunpack.c.l.b16 %v141
    %v440 = vunpack.c.l.b16 %v142
    %v441 = vunpack.c.l.b16 %v143
    %v442 = vunpack.c.l.b16 %v144
    %v443 = vunpack.c.l.b16 %v145
    %v444 = vunpack.c.l.b16 %v146
    %v445 = vunpack.c.l.b16 %v147
    %v446 = vunpack.c.l.b16 %v148
    %v447 = vunpack.c.l.b16 %v149
    %v448 = vunpack.c.l.b16 %v150
    %v449 = vunpack.c.l.b16 %v151
    %v450 = vunpack.c.l.b16 %v152
    %v451 = vunpack.c.l.b16 %v153
    %v452 = vunpack.c.l.b16 %v154
    %v453 = vunpack.c.l.b16 %v155
    %v454 = vunpack.c.l.b16 %v156
    %v455 = vunpack.c.l.b16 %v157
    %v456 = vunpack.c.l.b16 %v158
    %v457 = vunpack.c.l.b16 %v159
    %v458 = vunpack.c.l.b16 %v160
    %v459 = vunpack.c.l.b16 %v161
    %v460 = vunpack.c.l.b16 %v162
    %v461 = vunpack.c.l.b16 %v163
    %v462 = vunpack.c.l.b16 %v164
    %v463 = vunpack.c.l.b16 %v165
    %v464 = vunpack.c.l.b16 %v166
    %v465 = vunpack.c.l.b16 %v167
    %v466 = vunpack.c.l.b16 %v168
    %v467 = vunpack.c.l.b16 %v169
    %v468 = vunpack.c.l.b16 %v170
    %v469 = vunpack.c.l.b16 %v171
    %v470 = vunpack.c.l.b16 %v172
    %v471 = vunpack.c.l.b16 %v173
    %v472 = vunpack.c.l.b16 %v174
    %v473 = vunpack.c.l.b16 %v175
    %v474 = vunpack.c.l.b16 %v176
    %v475 = vunpack.c.l.b16 %v177
    %v476 = vunpack.c.l.b16 %v178
    %v477 = vunpack.c.l.b16 %v179
    %v478 = vunpack.c.l.b16 %v180
    %v479 = vunpack.c.l.b16 %v181
    %v480 = vunpack.c.l.b16 %v182
    %v481 = vunpack.c.l.b16 %v183
    %v482 = vunpack.c.l.b16 %v184
    %v483 = vunpack.c.l.b16 %v185
    %v484 = vunpack.c.l.b16 %v186
    %v485 = vunpack.c.l.b16 %v187
    %v486 = vpack.c.b16 %v359, %v358
    %v487 = vpack.c.b16 %v361, %v360
    %v488 = vpack.c.b16 %v363, %v362
    %v489 = vpack.c.b16 %v365, %v364
    %v490 = vpack.c.b16 %v367, %v366
    %v491 = vpack.c.b16 %v369, %v368
    %v492 = vpack.c.b16 %v371, %v370
    %v493 = vpack.c.b16 %v373, %v372
    %v494 = vpack.c.b16 %v375, %v374
    %v495 = vpack.c.b16 %v377, %v376
    %v496 = vpack.c.b16 %v379, %v378
    %v497 = vpack.c.b16 %v381, %v380
    %v498 = vpack.c.b16 %v383, %v382
    %v499 = vpack.c.b16 %v385, %v384
    %v500 = vpack.c.b16 %v387, %v386
    %v501 = vpack.c.b16 %v389, %v388
    %v502 = vpack.c.b16 %v391, %v390
    %v503 = vpack.c.b16 %v393, %v392
    %v504 = vpack.c.b16 %v395, %v394
    %v505 = vpack.c.b16 %v397, %v396
    %v506 = vpack.c.b16 %v399, %v398
    %v507 = vpack.c.b16 %v401, %v400
    %v508 = vpack.c.b16 %v403, %v402
    %v509 = vpack.c.b16 %v405, %v404
    %v510 = vpack.c.b16 %v407, %v406
    %v511 = vpack.c.b16 %v409, %v408
    %v512 = vpack.c.b16 %v411, %v410
    %v513 = vpack.c.b16 %v413, %v412
    %v514 = vpack.c.b16 %v415, %v414
    %v515 = vpack.c.b16 %v417, %v416
    %v516 = vpack.c.b16 %v419, %v418
    %v517 = vpack.c.b16 %v421, %v420
    %v518 = vpack.c.b16 %v423, %v422
    %v519 = vpack.c.b16 %v425, %v424
    %v520 = vpack.c.b16 %v427, %v426
    %v521 = vpack.c.b16 %v429, %v428
    %v522 = vpack.c.b16 %v431, %v430
    %v523 = vpack.c.b16 %v433, %v432
    %v524 = vpack.c.b16 %v435, %v434
    %v525 = vpack.c.b16 %v437, %v436
    %v526 = vpack.c.b16 %v439, %v438
    %v527 = vpack.c.b16 %v441, %v440
    %v528 = vpack.c.b16 %v443, %v442
    %v529 = vpack.c.b16 %v445, %v444
    %v530 = vpack.c.b16 %v447, %v446
    %v531 = vpack.c.b16 %v449, %v448
    %v532 = vpack.c.b16 %v451, %v450
    %v533 = vpack.c.b16 %v453, %v452
    %v534 = vpack.c.b16 %v455, %v454
    %v535 = vpack.c.b16 %v457, %v456
    %v536 = vpack.c.b16 %v459, %v458
    %v537 = vpack.c.b16 %v461, %v460
    %v538 = vpack.c.b16 %v463, %v462
    %v539 = vpack.c.b16 %v465, %v464
    %v540 = vpack.c.b16 %v467, %v466
    %v541 = vpack.c.b16 %v469, %v468
    %v542 = vpack.c.b16 %v471, %v470
    %v543 = vpack.c.b16 %v473, %v472
    %v544 = vpack.c.b16 %v475, %v474
    %v545 = vpack.c.b16 %v477, %v476
    %v546 = vpack.c.b16 %v479, %v478
    %v547 = vpack.c.b16 %v481, %v480
    %v548 = vpack.c.b16 %v483, %v482
    %v549 = vpack.c.b16 %v485, %v484
    %614 = vmatpush.bf16.msra.mxu0 %v493
    %615 = vmatpush.bf16.msra.mxu0 %v492
    %616 = vmatpush.bf16.msra.mxu0 %v491
    %617 = vmatpush.bf16.msra.mxu0 %v490
    %618 = vmatpush.bf16.msra.mxu0 %v489
    %619 = vmatpush.bf16.msra.mxu0 %v488
    %620 = vmatpush.bf16.msra.mxu0 %v487
    %621 = vmatpush.bf16.msra.mxu0 %v486
    %622 = vmatmul.bf16.gmra.mxu0 %v214
    %v623 = vpop.f32.mrf.mxu0
    %v624 = vadd.f32 %v189, %v623
    %v625 = vpop.f32.mrf.mxu0
    %v626 = vadd.f32 %v189, %v625
    %627 = vdwg.mxu0
    %628 = vmatpush.bf16.msra.mxu0 %v501
    %629 = vmatpush.bf16.msra.mxu0 %v500
    %630 = vmatpush.bf16.msra.mxu0 %v499
    %631 = vmatpush.bf16.msra.mxu0 %v498
    %632 = vmatpush.bf16.msra.mxu0 %v497
    %633 = vmatpush.bf16.msra.mxu0 %v496
    %634 = vmatpush.bf16.msra.mxu0 %v495
    %635 = vmatpush.bf16.msra.mxu0 %v494
    %636 = vmatmul.bf16.gmra.mxu0 %v215
    %v637 = vpop.f32.mrf.mxu0
    %v638 = vadd.f32 %v624, %v637
    %v639 = vpop.f32.mrf.mxu0
    %v640 = vadd.f32 %v626, %v639
    %641 = vdwg.mxu0
    %642 = vmatpush.bf16.msra.mxu0 %v509
    %643 = vmatpush.bf16.msra.mxu0 %v508
    %644 = vmatpush.bf16.msra.mxu0 %v507
    %645 = vmatpush.bf16.msra.mxu0 %v506
    %646 = vmatpush.bf16.msra.mxu0 %v505
    %647 = vmatpush.bf16.msra.mxu0 %v504
    %648 = vmatpush.bf16.msra.mxu0 %v503
    %649 = vmatpush.bf16.msra.mxu0 %v502
    %650 = vmatmul.bf16.gmra.mxu0 %v216
    %v651 = vpop.f32.mrf.mxu0
    %v652 = vadd.f32 %v638, %v651
    %v653 = vpop.f32.mrf.mxu0
    %v654 = vadd.f32 %v640, %v653
    %655 = vdwg.mxu0
    %656 = vmatpush.bf16.msra.mxu0 %v517
    %657 = vmatpush.bf16.msra.mxu0 %v516
    %658 = vmatpush.bf16.msra.mxu0 %v515
    %659 = vmatpush.bf16.msra.mxu0 %v514
    %660 = vmatpush.bf16.msra.mxu0 %v513
    %661 = vmatpush.bf16.msra.mxu0 %v512
    %662 = vmatpush.bf16.msra.mxu0 %v511
    %663 = vmatpush.bf16.msra.mxu0 %v510
    %664 = vmatmul.bf16.gmra.mxu0 %v217
    %v665 = vpop.f32.mrf.mxu0
    %v666 = vadd.f32 %v652, %v665
    %v667 = vpop.f32.mrf.mxu0
    %v668 = vadd.f32 %v654, %v667
    %669 = vdwg.mxu0
    %670 = vmatpush.bf16.msra.mxu0 %v525
    %671 = vmatpush.bf16.msra.mxu0 %v524
    %672 = vmatpush.bf16.msra.mxu0 %v523
    %673 = vmatpush.bf16.msra.mxu0 %v522
    %674 = vmatpush.bf16.msra.mxu0 %v521
    %675 = vmatpush.bf16.msra.mxu0 %v520
    %676 = vmatpush.bf16.msra.mxu0 %v519
    %677 = vmatpush.bf16.msra.mxu0 %v518
    %678 = vmatmul.bf16.gmra.mxu0 %v218
    %v679 = vpop.f32.mrf.mxu0
    %v680 = vadd.f32 %v666, %v679
    %v681 = vpop.f32.mrf.mxu0
    %v682 = vadd.f32 %v668, %v681
    %683 = vdwg.mxu0
    %684 = vmatpush.bf16.msra.mxu0 %v533
    %685 = vmatpush.bf16.msra.mxu0 %v532
    %686 = vmatpush.bf16.msra.mxu0 %v531
    %687 = vmatpush.bf16.msra.mxu0 %v530
    %688 = vmatpush.bf16.msra.mxu0 %v529
    %689 = vmatpush.bf16.msra.mxu0 %v528
    %690 = vmatpush.bf16.msra.mxu0 %v527
    %691 = vmatpush.bf16.msra.mxu0 %v526
    %692 = vmatmul.bf16.gmra.mxu0 %v219
    %v693 = vpop.f32.mrf.mxu0
    %v694 = vadd.f32 %v680, %v693
    %v695 = vpop.f32.mrf.mxu0
    %v696 = vadd.f32 %v682, %v695
    %697 = vdwg.mxu0
    %698 = vmatpush.bf16.msra.mxu0 %v541
    %699 = vmatpush.bf16.msra.mxu0 %v540
    %700 = vmatpush.bf16.msra.mxu0 %v539
    %701 = vmatpush.bf16.msra.mxu0 %v538
    %702 = vmatpush.bf16.msra.mxu0 %v537
    %703 = vmatpush.bf16.msra.mxu0 %v536
    %704 = vmatpush.bf16.msra.mxu0 %v535
    %705 = vmatpush.bf16.msra.mxu0 %v534
    %706 = vmatmul.bf16.gmra.mxu0 %v220
    %v707 = vpop.f32.mrf.mxu0
    %v708 = vadd.f32 %v694, %v707
    %v709 = vpop.f32.mrf.mxu0
    %v710 = vadd.f32 %v696, %v709
    %711 = vdwg.mxu0
    %712 = vmatpush.bf16.msra.mxu0 %v549
    %713 = vmatpush.bf16.msra.mxu0 %v548
    %714 = vmatpush.bf16.msra.mxu0 %v547
    %715 = vmatpush.bf16.msra.mxu0 %v546
    %716 = vmatpush.bf16.msra.mxu0 %v545
    %717 = vmatpush.bf16.msra.mxu0 %v544
    %718 = vmatpush.bf16.msra.mxu0 %v543
    %719 = vmatpush.bf16.msra.mxu0 %v542
    %720 = vmatmul.bf16.gmra.mxu0 %v221
    %v721 = vpop.f32.mrf.mxu0
    %v722 = vadd.f32 %v708, %v721
    %v723 = vpop.f32.mrf.mxu0
    %v724 = vadd.f32 %v710, %v723
    %725 = vdwg.mxu0
    %vm726 = vcmp.gt.f32.partialorder %v722, 0.0
    %vm727 = vcmp.gt.f32.partialorder %v724, 0.0
    %v728 = vmul.f32 %v722, 0.01
    %v729 = vmul.f32 %v724, 0.01
    %v730 = vsel %vm726, %v722, %v728
    %v731 = vsel %vm727, %v724, %v729
    %v732 = vpack.c.bf16 %v731, %v730
    %v733 = vld [vmem:[%s2] sm:$0xf]
    %v734 = vld [vmem:[%s2 + $0x4] sm:$0xf]
    %v735 = vld [vmem:[%s2 + $0x8] sm:$0xf]
    %v736 = vld [vmem:[%s2 + $0xc] sm:$0xf]
    %v737 = vld [vmem:[%s2 + $0x10] sm:$0xf]
    %v738 = vld [vmem:[%s2 + $0x14] sm:$0xf]
    %v739 = vld [vmem:[%s2 + $0x18] sm:$0xf]
    %v740 = vld [vmem:[%s2 + $0x1c] sm:$0xf]
    %v741 = vld [vmem:[%s2 + $0x20] sm:$0xf]
    %v742 = vld [vmem:[%s2 + $0x24] sm:$0xf]
    %v743 = vld [vmem:[%s2 + $0x28] sm:$0xf]
    %v744 = vld [vmem:[%s2 + $0x2c] sm:$0xf]
    %v745 = vld [vmem:[%s2 + $0x30] sm:$0xf]
    %v746 = vld [vmem:[%s2 + $0x34] sm:$0xf]
    %v747 = vld [vmem:[%s2 + $0x38] sm:$0xf]
    %v748 = vld [vmem:[%s2 + $0x3c] sm:$0xf]
    %v749 = vld [vmem:[%s3 + $0x1] sm:$0x1]
    %v750 = vperm.slane %v749, 0
    %v767 = vunpack.c.l.b16 %v733
    %v768 = vunpack.c.l.b16 %v734
    %v769 = vunpack.c.l.b16 %v735
    %v770 = vunpack.c.l.b16 %v736
    %v771 = vunpack.c.l.b16 %v737
    %v772 = vunpack.c.l.b16 %v738
    %v773 = vunpack.c.l.b16 %v739
    %v774 = vunpack.c.l.b16 %v740
    %v775 = vunpack.c.l.b16 %v741
    %v776 = vunpack.c.l.b16 %v742
    %v777 = vunpack.c.l.b16 %v743
    %v778 = vunpack.c.l.b16 %v744
    %v779 = vunpack.c.l.b16 %v745
    %v780 = vunpack.c.l.b16 %v746
    %v781 = vunpack.c.l.b16 %v747
    %v782 = vunpack.c.l.b16 %v748
    %v783 = vpack.c.b16 %v768, %v767
    %v784 = vpack.c.b16 %v770, %v769
    %v785 = vpack.c.b16 %v772, %v771
    %v786 = vpack.c.b16 %v774, %v773
    %v787 = vpack.c.b16 %v776, %v775
    %v788 = vpack.c.b16 %v778, %v777
    %v789 = vpack.c.b16 %v780, %v779
    %v790 = vpack.c.b16 %v782, %v781
    %799 = vmatpush.bf16.msra.mxu0 %v790
    %800 = vmatpush.bf16.msra.mxu0 %v789
    %801 = vmatpush.bf16.msra.mxu0 %v788
    %802 = vmatpush.bf16.msra.mxu0 %v787
    %803 = vmatpush.bf16.msra.mxu0 %v786
    %804 = vmatpush.bf16.msra.mxu0 %v785
    %805 = vmatpush.bf16.msra.mxu0 %v784
    %806 = vmatpush.bf16.msra.mxu0 %v783
    %807 = vmatmul.bf16.gmra.mxu0 %v732
    %v808 = vpop.f32.mrf.mxu0
    %v809 = vadd.f32 %v750, %v808
    %v810 = vpop.f32.mrf.mxu0
    %v811 = vadd.f32 %v750, %v810
    %812 = vdwg.mxu0
    %vm813 = vcmp.gt.f32.partialorder %v809, 0.0
    %vm814 = vcmp.gt.f32.partialorder %v811, 0.0
    %v815 = vmul.f32 %v809, 0.01
    %v816 = vmul.f32 %v811, 0.01
    %v817 = vsel %vm813, %v809, %v815
    %v818 = vsel %vm814, %v811, %v816
    %v819 = vpack.c.bf16 %v818, %v817
    %s820 = scalar_lea.vmem %s2, 64
    %v821 = vld [vmem:[%s820] sm:$0xf]
    %v822 = vld [vmem:[%s820 + $0x4] sm:$0xf]
    %v823 = vld [vmem:[%s820 + $0x8] sm:$0xf]
    %v824 = vld [vmem:[%s820 + $0xc] sm:$0xf]
    %v825 = vld [vmem:[%s820 + $0x10] sm:$0xf]
    %v826 = vld [vmem:[%s820 + $0x14] sm:$0xf]
    %v827 = vld [vmem:[%s820 + $0x18] sm:$0xf]
    %v828 = vld [vmem:[%s820 + $0x1c] sm:$0xf]
    %v829 = vld [vmem:[%s820 + $0x20] sm:$0xf]
    %v830 = vld [vmem:[%s820 + $0x24] sm:$0xf]
    %v831 = vld [vmem:[%s820 + $0x28] sm:$0xf]
    %v832 = vld [vmem:[%s820 + $0x2c] sm:$0xf]
    %v833 = vld [vmem:[%s820 + $0x30] sm:$0xf]
    %v834 = vld [vmem:[%s820 + $0x34] sm:$0xf]
    %v835 = vld [vmem:[%s820 + $0x38] sm:$0xf]
    %v836 = vld [vmem:[%s820 + $0x3c] sm:$0xf]
    %v837 = vld [vmem:[%s3 + $0x2] sm:$0x1]
    %v838 = vperm.slane %v837, 0
    %v855 = vunpack.c.l.b16 %v821
    %v856 = vunpack.c.l.b16 %v822
    %v857 = vunpack.c.l.b16 %v823
    %v858 = vunpack.c.l.b16 %v824
    %v859 = vunpack.c.l.b16 %v825
    %v860 = vunpack.c.l.b16 %v826
    %v861 = vunpack.c.l.b16 %v827
    %v862 = vunpack.c.l.b16 %v828
    %v863 = vunpack.c.l.b16 %v829
    %v864 = vunpack.c.l.b16 %v830
    %v865 = vunpack.c.l.b16 %v831
    %v866 = vunpack.c.l.b16 %v832
    %v867 = vunpack.c.l.b16 %v833
    %v868 = vunpack.c.l.b16 %v834
    %v869 = vunpack.c.l.b16 %v835
    %v870 = vunpack.c.l.b16 %v836
    %v871 = vpack.c.b16 %v856, %v855
    %v872 = vpack.c.b16 %v858, %v857
    %v873 = vpack.c.b16 %v860, %v859
    %v874 = vpack.c.b16 %v862, %v861
    %v875 = vpack.c.b16 %v864, %v863
    %v876 = vpack.c.b16 %v866, %v865
    %v877 = vpack.c.b16 %v868, %v867
    %v878 = vpack.c.b16 %v870, %v869
    %887 = vmatpush.bf16.msra.mxu0 %v878
    %888 = vmatpush.bf16.msra.mxu0 %v877
    %889 = vmatpush.bf16.msra.mxu0 %v876
    %890 = vmatpush.bf16.msra.mxu0 %v875
    %891 = vmatpush.bf16.msra.mxu0 %v874
    %892 = vmatpush.bf16.msra.mxu0 %v873
    %893 = vmatpush.bf16.msra.mxu0 %v872
    %894 = vmatpush.bf16.msra.mxu0 %v871
    %895 = vmatmul.bf16.gmra.mxu0 %v819
    %v896 = vpop.f32.mrf.mxu0
    %v897 = vadd.f32 %v838, %v896
    %v898 = vpop.f32.mrf.mxu0
    %v899 = vadd.f32 %v838, %v898
    %900 = vdwg.mxu0
    %vm901 = vcmp.gt.f32.partialorder %v897, 0.0
    %vm902 = vcmp.gt.f32.partialorder %v899, 0.0
    %v903 = vmul.f32 %v897, 0.01
    %v904 = vmul.f32 %v899, 0.01
    %v905 = vsel %vm901, %v897, %v903
    %v906 = vsel %vm902, %v899, %v904
    %v907 = vpack.c.bf16 %v906, %v905
    %s908 = scalar_lea.vmem %s2, 128
    %v909 = vld [vmem:[%s908] sm:$0xf]
    %v910 = vld [vmem:[%s908 + $0x4] sm:$0xf]
    %v911 = vld [vmem:[%s908 + $0x8] sm:$0xf]
    %v912 = vld [vmem:[%s908 + $0xc] sm:$0xf]
    %v913 = vld [vmem:[%s908 + $0x10] sm:$0xf]
    %v914 = vld [vmem:[%s908 + $0x14] sm:$0xf]
    %v915 = vld [vmem:[%s908 + $0x18] sm:$0xf]
    %v916 = vld [vmem:[%s908 + $0x1c] sm:$0xf]
    %v917 = vld [vmem:[%s908 + $0x20] sm:$0xf]
    %v918 = vld [vmem:[%s908 + $0x24] sm:$0xf]
    %v919 = vld [vmem:[%s908 + $0x28] sm:$0xf]
    %v920 = vld [vmem:[%s908 + $0x2c] sm:$0xf]
    %v921 = vld [vmem:[%s908 + $0x30] sm:$0xf]
    %v922 = vld [vmem:[%s908 + $0x34] sm:$0xf]
    %v923 = vld [vmem:[%s908 + $0x38] sm:$0xf]
    %v924 = vld [vmem:[%s908 + $0x3c] sm:$0xf]
    %v925 = vld [vmem:[%s3 + $0x3] sm:$0x1]
    %v926 = vperm.slane %v925, 0
    %v943 = vunpack.c.l.b16 %v909
    %v944 = vunpack.c.l.b16 %v910
    %v945 = vunpack.c.l.b16 %v911
    %v946 = vunpack.c.l.b16 %v912
    %v947 = vunpack.c.l.b16 %v913
    %v948 = vunpack.c.l.b16 %v914
    %v949 = vunpack.c.l.b16 %v915
    %v950 = vunpack.c.l.b16 %v916
    %v951 = vunpack.c.l.b16 %v917
    %v952 = vunpack.c.l.b16 %v918
    %v953 = vunpack.c.l.b16 %v919
    %v954 = vunpack.c.l.b16 %v920
    %v955 = vunpack.c.l.b16 %v921
    %v956 = vunpack.c.l.b16 %v922
    %v957 = vunpack.c.l.b16 %v923
    %v958 = vunpack.c.l.b16 %v924
    %v959 = vpack.c.b16 %v944, %v943
    %v960 = vpack.c.b16 %v946, %v945
    %v961 = vpack.c.b16 %v948, %v947
    %v962 = vpack.c.b16 %v950, %v949
    %v963 = vpack.c.b16 %v952, %v951
    %v964 = vpack.c.b16 %v954, %v953
    %v965 = vpack.c.b16 %v956, %v955
    %v966 = vpack.c.b16 %v958, %v957
    %975 = vmatpush.bf16.msra.mxu0 %v966
    %976 = vmatpush.bf16.msra.mxu0 %v965
    %977 = vmatpush.bf16.msra.mxu0 %v964
    %978 = vmatpush.bf16.msra.mxu0 %v963
    %979 = vmatpush.bf16.msra.mxu0 %v962
    %980 = vmatpush.bf16.msra.mxu0 %v961
    %981 = vmatpush.bf16.msra.mxu0 %v960
    %982 = vmatpush.bf16.msra.mxu0 %v959
    %983 = vmatmul.bf16.gmra.mxu0 %v907
    %v984 = vpop.f32.mrf.mxu0
    %v985 = vadd.f32 %v926, %v984
    %v986 = vpop.f32.mrf.mxu0
    %v987 = vadd.f32 %v926, %v986
    %988 = vdwg.mxu0
    %vm989 = vcmp.gt.f32.partialorder %v985, 0.0
    %vm990 = vcmp.gt.f32.partialorder %v987, 0.0
    %v991 = vmul.f32 %v985, 0.01
    %v992 = vmul.f32 %v987, 0.01
    %v993 = vsel %vm989, %v985, %v991
    %v994 = vsel %vm990, %v987, %v992
    %v995 = vpack.c.bf16 %v994, %v993
    %s996 = scalar_lea.vmem %s2, 192
    %v997 = vld [vmem:[%s996] sm:$0xf]
    %v998 = vld [vmem:[%s996 + $0x4] sm:$0xf]
    %v999 = vld [vmem:[%s996 + $0x8] sm:$0xf]
    %v1000 = vld [vmem:[%s996 + $0xc] sm:$0xf]
    %v1001 = vld [vmem:[%s996 + $0x10] sm:$0xf]
    %v1002 = vld [vmem:[%s996 + $0x14] sm:$0xf]
    %v1003 = vld [vmem:[%s996 + $0x18] sm:$0xf]
    %v1004 = vld [vmem:[%s996 + $0x1c] sm:$0xf]
    %v1005 = vld [vmem:[%s996 + $0x20] sm:$0xf]
    %v1006 = vld [vmem:[%s996 + $0x24] sm:$0xf]
    %v1007 = vld [vmem:[%s996 + $0x28] sm:$0xf]
    %v1008 = vld [vmem:[%s996 + $0x2c] sm:$0xf]
    %v1009 = vld [vmem:[%s996 + $0x30] sm:$0xf]
    %v1010 = vld [vmem:[%s996 + $0x34] sm:$0xf]
    %v1011 = vld [vmem:[%s996 + $0x38] sm:$0xf]
    %v1012 = vld [vmem:[%s996 + $0x3c] sm:$0xf]
    %v1013 = vld [vmem:[%s3 + $0x4] sm:$0x1]
    %v1014 = vperm.slane %v1013, 0
    %v1031 = vunpack.c.l.b16 %v997
    %v1032 = vunpack.c.l.b16 %v998
    %v1033 = vunpack.c.l.b16 %v999
    %v1034 = vunpack.c.l.b16 %v1000
    %v1035 = vunpack.c.l.b16 %v1001
    %v1036 = vunpack.c.l.b16 %v1002
    %v1037 = vunpack.c.l.b16 %v1003
    %v1038 = vunpack.c.l.b16 %v1004
    %v1039 = vunpack.c.l.b16 %v1005
    %v1040 = vunpack.c.l.b16 %v1006
    %v1041 = vunpack.c.l.b16 %v1007
    %v1042 = vunpack.c.l.b16 %v1008
    %v1043 = vunpack.c.l.b16 %v1009
    %v1044 = vunpack.c.l.b16 %v1010
    %v1045 = vunpack.c.l.b16 %v1011
    %v1046 = vunpack.c.l.b16 %v1012
    %v1047 = vpack.c.b16 %v1032, %v1031
    %v1048 = vpack.c.b16 %v1034, %v1033
    %v1049 = vpack.c.b16 %v1036, %v1035
    %v1050 = vpack.c.b16 %v1038, %v1037
    %v1051 = vpack.c.b16 %v1040, %v1039
    %v1052 = vpack.c.b16 %v1042, %v1041
    %v1053 = vpack.c.b16 %v1044, %v1043
    %v1054 = vpack.c.b16 %v1046, %v1045
    %1063 = vmatpush.bf16.msra.mxu0 %v1054
    %1064 = vmatpush.bf16.msra.mxu0 %v1053
    %1065 = vmatpush.bf16.msra.mxu0 %v1052
    %1066 = vmatpush.bf16.msra.mxu0 %v1051
    %1067 = vmatpush.bf16.msra.mxu0 %v1050
    %1068 = vmatpush.bf16.msra.mxu0 %v1049
    %1069 = vmatpush.bf16.msra.mxu0 %v1048
    %1070 = vmatpush.bf16.msra.mxu0 %v1047
    %1071 = vmatmul.bf16.gmra.mxu0 %v995
    %v1072 = vpop.f32.mrf.mxu0
    %v1073 = vadd.f32 %v1014, %v1072
    %v1074 = vpop.f32.mrf.mxu0
    %v1075 = vadd.f32 %v1014, %v1074
    %1076 = vdwg.mxu0
    %vm1077 = vcmp.gt.f32.partialorder %v1073, 0.0
    %vm1078 = vcmp.gt.f32.partialorder %v1075, 0.0
    %v1079 = vmul.f32 %v1073, 0.01
    %v1080 = vmul.f32 %v1075, 0.01
    %v1081 = vsel %vm1077, %v1073, %v1079
    %v1082 = vsel %vm1078, %v1075, %v1080
    %v1083 = vpack.c.bf16 %v1082, %v1081
    %s1084 = scalar_lea.vmem %s2, 256
    %v1085 = vld [vmem:[%s1084] sm:$0xf]
    %v1086 = vld [vmem:[%s1084 + $0x4] sm:$0xf]
    %v1087 = vld [vmem:[%s1084 + $0x8] sm:$0xf]
    %v1088 = vld [vmem:[%s1084 + $0xc] sm:$0xf]
    %v1089 = vld [vmem:[%s1084 + $0x10] sm:$0xf]
    %v1090 = vld [vmem:[%s1084 + $0x14] sm:$0xf]
    %v1091 = vld [vmem:[%s1084 + $0x18] sm:$0xf]
    %v1092 = vld [vmem:[%s1084 + $0x1c] sm:$0xf]
    %v1093 = vld [vmem:[%s1084 + $0x20] sm:$0xf]
    %v1094 = vld [vmem:[%s1084 + $0x24] sm:$0xf]
    %v1095 = vld [vmem:[%s1084 + $0x28] sm:$0xf]
    %v1096 = vld [vmem:[%s1084 + $0x2c] sm:$0xf]
    %v1097 = vld [vmem:[%s1084 + $0x30] sm:$0xf]
    %v1098 = vld [vmem:[%s1084 + $0x34] sm:$0xf]
    %v1099 = vld [vmem:[%s1084 + $0x38] sm:$0xf]
    %v1100 = vld [vmem:[%s1084 + $0x3c] sm:$0xf]
    %v1101 = vld [vmem:[%s3 + $0x5] sm:$0x1]
    %v1102 = vperm.slane %v1101, 0
    %v1119 = vunpack.c.l.b16 %v1085
    %v1120 = vunpack.c.l.b16 %v1086
    %v1121 = vunpack.c.l.b16 %v1087
    %v1122 = vunpack.c.l.b16 %v1088
    %v1123 = vunpack.c.l.b16 %v1089
    %v1124 = vunpack.c.l.b16 %v1090
    %v1125 = vunpack.c.l.b16 %v1091
    %v1126 = vunpack.c.l.b16 %v1092
    %v1127 = vunpack.c.l.b16 %v1093
    %v1128 = vunpack.c.l.b16 %v1094
    %v1129 = vunpack.c.l.b16 %v1095
    %v1130 = vunpack.c.l.b16 %v1096
    %v1131 = vunpack.c.l.b16 %v1097
    %v1132 = vunpack.c.l.b16 %v1098
    %v1133 = vunpack.c.l.b16 %v1099
    %v1134 = vunpack.c.l.b16 %v1100
    %v1135 = vpack.c.b16 %v1120, %v1119
    %v1136 = vpack.c.b16 %v1122, %v1121
    %v1137 = vpack.c.b16 %v1124, %v1123
    %v1138 = vpack.c.b16 %v1126, %v1125
    %v1139 = vpack.c.b16 %v1128, %v1127
    %v1140 = vpack.c.b16 %v1130, %v1129
    %v1141 = vpack.c.b16 %v1132, %v1131
    %v1142 = vpack.c.b16 %v1134, %v1133
    %1151 = vmatpush.bf16.msra.mxu0 %v1142
    %1152 = vmatpush.bf16.msra.mxu0 %v1141
    %1153 = vmatpush.bf16.msra.mxu0 %v1140
    %1154 = vmatpush.bf16.msra.mxu0 %v1139
    %1155 = vmatpush.bf16.msra.mxu0 %v1138
    %1156 = vmatpush.bf16.msra.mxu0 %v1137
    %1157 = vmatpush.bf16.msra.mxu0 %v1136
    %1158 = vmatpush.bf16.msra.mxu0 %v1135
    %1159 = vmatmul.bf16.gmra.mxu0 %v1083
    %v1160 = vpop.f32.mrf.mxu0
    %v1161 = vadd.f32 %v1102, %v1160
    %v1162 = vpop.f32.mrf.mxu0
    %v1163 = vadd.f32 %v1102, %v1162
    %1164 = vdwg.mxu0
    %vm1165 = vcmp.gt.f32.partialorder %v1161, 0.0
    %vm1166 = vcmp.gt.f32.partialorder %v1163, 0.0
    %v1167 = vmul.f32 %v1161, 0.01
    %v1168 = vmul.f32 %v1163, 0.01
    %v1169 = vsel %vm1165, %v1161, %v1167
    %v1170 = vsel %vm1166, %v1163, %v1168
    %v1171 = vpack.c.bf16 %v1170, %v1169
    %v1172 = vld [vmem:[#allocation4] sm:$0xf]
    %v1173 = vld [vmem:[#allocation4 + $0x4] sm:$0xf]
    %v1174 = vld [vmem:[#allocation4 + $0x8] sm:$0xf]
    %v1175 = vld [vmem:[#allocation4 + $0xc] sm:$0xf]
    %v1176 = vld [vmem:[#allocation4 + $0x10] sm:$0xf]
    %v1177 = vld [vmem:[#allocation4 + $0x14] sm:$0xf]
    %v1178 = vld [vmem:[#allocation4 + $0x18] sm:$0xf]
    %v1179 = vld [vmem:[#allocation4 + $0x1c] sm:$0xf]
    %v1180 = vld [vmem:[#allocation4 + $0x20] sm:$0xf]
    %v1181 = vld [vmem:[#allocation4 + $0x24] sm:$0xf]
    %v1182 = vld [vmem:[#allocation4 + $0x28] sm:$0xf]
    %v1183 = vld [vmem:[#allocation4 + $0x2c] sm:$0xf]
    %v1184 = vld [vmem:[#allocation4 + $0x30] sm:$0xf]
    %v1185 = vld [vmem:[#allocation4 + $0x34] sm:$0xf]
    %v1186 = vld [vmem:[#allocation4 + $0x38] sm:$0xf]
    %v1187 = vld [vmem:[#allocation4 + $0x3c] sm:$0xf]
    %v1188 = vld [vmem:[%s3 + $0x6] sm:$0x1]
    %v1189 = vperm.slane %v1188, 0
    %v1206 = vunpack.c.l.b16 %v1172
    %v1207 = vunpack.c.l.b16 %v1173
    %v1208 = vunpack.c.l.b16 %v1174
    %v1209 = vunpack.c.l.b16 %v1175
    %v1210 = vunpack.c.l.b16 %v1176
    %v1211 = vunpack.c.l.b16 %v1177
    %v1212 = vunpack.c.l.b16 %v1178
    %v1213 = vunpack.c.l.b16 %v1179
    %v1214 = vunpack.c.l.b16 %v1180
    %v1215 = vunpack.c.l.b16 %v1181
    %v1216 = vunpack.c.l.b16 %v1182
    %v1217 = vunpack.c.l.b16 %v1183
    %v1218 = vunpack.c.l.b16 %v1184
    %v1219 = vunpack.c.l.b16 %v1185
    %v1220 = vunpack.c.l.b16 %v1186
    %v1221 = vunpack.c.l.b16 %v1187
    %v1222 = vpack.c.b16 %v1207, %v1206
    %v1223 = vpack.c.b16 %v1209, %v1208
    %v1224 = vpack.c.b16 %v1211, %v1210
    %v1225 = vpack.c.b16 %v1213, %v1212
    %v1226 = vpack.c.b16 %v1215, %v1214
    %v1227 = vpack.c.b16 %v1217, %v1216
    %v1228 = vpack.c.b16 %v1219, %v1218
    %v1229 = vpack.c.b16 %v1221, %v1220
    %1238 = vmatpush.bf16.msra.mxu0 %v1229
    %1239 = vmatpush.bf16.msra.mxu0 %v1228
    %1240 = vmatpush.bf16.msra.mxu0 %v1227
    %1241 = vmatpush.bf16.msra.mxu0 %v1226
    %1242 = vmatpush.bf16.msra.mxu0 %v1225
    %1243 = vmatpush.bf16.msra.mxu0 %v1224
    %1244 = vmatpush.bf16.msra.mxu0 %v1223
    %1245 = vmatpush.bf16.msra.mxu0 %v1222
    %1246 = vmatmul.bf16.gmra.mxu0 %v1171
    %v1247 = vpop.f32.mrf.mxu0
    %v1248 = vadd.f32 %v1189, %v1247
    %v1249 = vpop.f32.mrf.mxu0
    %v1250 = vadd.f32 %v1189, %v1249
    %1251 = vdwg.mxu0
    %v1252 = vpack.c.bf16 %v1248, %v1248
    %v1253 = vpack.c.bf16 %v1250, %v1250
    %1254 = vst [vmem:[%s5] sm:$0xf] %v1252
    %1255 = vst [vmem:[%s5 + $0x4] sm:$0xf] %v1253
    // Predicated region
    $region30: #{mlp_forward.1} parent=1 // pred_check
      _
    $region31: #{mlp_forward.1} parent=1 // pred_check_branch
      %1257 = sbr.rel (0) target = $region33
    $region32: #{mlp_forward.1} parent=1 // pred_region
      _
    $region33: #{mlp_forward.1} parent=1 // pred_fallthru
      _
    // Predicated region
    $region34: #{mlp_forward.1} parent=1 // pred_check
      _
    $region35: #{mlp_forward.1} parent=1 // pred_check_branch
      %1259 = sbr.rel (0) target = $region37
    $region36: #{mlp_forward.1} parent=1 // pred_region
      _
    $region37: #{mlp_forward.1} parent=1 // pred_fallthru
      _
    %1260 = vsyncpa [#allocation3], 1
    %1261 = vsyncpa [#allocation5], 1

</llo_original>
